<compile_context>
chip_gen: v6e
topology: v6e:2x2x1
jax: 0.10.0
libtpu: 0.0.40
codegen_flags: <defaults>
</compile_context>

<pallas_src>
import jax
import jax.numpy as jnp
from jax.experimental import pallas as pl
from jax.experimental.pallas import tpu as pltpu


def _hbm_copy_kernel(x_hbm, o_hbm, sem):
    # Entire forward pass: out = x, realized as one HBM->HBM DMA.
    cp = pltpu.make_async_copy(x_hbm, o_hbm, sem)
    cp.start()
    cp.wait()


def identity_pallas(x):
    """Identity implemented as a single HBM->HBM DMA Pallas kernel.

    No padding, no reshape, no VMEM staging: the input array is handed to the
    kernel as a raw HBM ref (memory_space=pl.ANY) and copied to the output
    HBM buffer with one async DMA.  Works for any rank / any (non-empty)
    shape, since no (8,128) tiling constraint applies.
    """
    if x.size == 0 or x.ndim == 0:
        # No-copy fast path for degenerate inputs (identity is exact).
        return x

    itemsize = jnp.dtype(x.dtype).itemsize
    return pl.pallas_call(
        _hbm_copy_kernel,
        out_shape=jax.ShapeDtypeStruct(x.shape, x.dtype),
        in_specs=[pl.BlockSpec(memory_space=pl.ANY)],
        out_specs=pl.BlockSpec(memory_space=pl.ANY),
        scratch_shapes=[pltpu.SemaphoreType.DMA],
        cost_estimate=pl.CostEstimate(
            flops=0,
            transcendentals=0,
            bytes_accessed=2 * x.size * itemsize,
        ),
    )(x)


def test_forward(x):
    """Forward pass of the module: identity."""
    return identity_pallas(x)


def init_params():
    """Deterministic init of the (unused) nn.Linear(10, 10) parameters,
    mirroring the PyTorch module's __init__.  Unused in forward()."""
    key = jax.random.PRNGKey(42)
    kw, kb = jax.random.split(key)
    bound = 1.0 / jnp.sqrt(10.0)
    w = jax.random.uniform(kw, (10, 10), jnp.float32, -bound, bound)
    b = jax.random.uniform(kb, (10,), jnp.float32, -bound, bound)
    return {"layers": {"abc": {"weight": w, "bias": b}}}


if __name__ == "__main__":
    params = init_params()  # constructed but unused, like the PyTorch module

    key = jax.random.PRNGKey(0)
    k1, k2, k3 = jax.random.split(key, 3)

    # Small shape consistent with the module (Linear(10,10) hints features=10).
    x_small = jax.random.normal(k1, (8, 10), dtype=jnp.float32)
    y_small = jax.block_until_ready(test_forward(x_small))
    assert y_small.shape == x_small.shape and y_small.dtype == x_small.dtype
    assert bool(jnp.allclose(y_small, x_small)), "identity forward mismatch (small)"

    # Larger 2-D input.
    x_big = jax.random.normal(k2, (16, 640), dtype=jnp.float32)
    y_big = jax.block_until_ready(test_forward(x_big))
    assert y_big.shape == x_big.shape and y_big.dtype == x_big.dtype
    assert bool(jnp.allclose(y_big, x_big)), "identity forward mismatch (big)"

    # Ragged 1-D input: exercises the no-pad / no-reshape path.
    x_ragged = jax.random.normal(k3, (37,), dtype=jnp.float32)
    y_ragged = jax.block_until_ready(test_forward(x_ragged))
    assert y_ragged.shape == x_ragged.shape and y_ragged.dtype == x_ragged.dtype
    assert bool(jnp.allclose(y_ragged, x_ragged)), "identity forward mismatch (ragged)"

    print("KERNEL_OK")
</pallas_src>

<mosaic_0001>
module attributes {stable_mosaic.version = 11 : i64} {
  func.func @_hbm_copy_kernel(%arg0: memref<8x10xf32, #tpu.memory_space<any>>, %arg1: memref<8x10xf32, #tpu.memory_space<any>>, %arg2: memref<!tpu.dma_semaphore, #tpu.memory_space<semaphore_mem>>) attributes {dimension_semantics = [], scalar_prefetch = 0 : i64, scratch_operands = 1 : i64, tpu.core_type = #tpu.core_type<tc>} {
    tpu.enqueue_dma source(%arg0 : memref<8x10xf32, #tpu.memory_space<any>>) target(%arg1 : memref<8x10xf32, #tpu.memory_space<any>>) target_semaphore(%arg2 : memref<!tpu.dma_semaphore, #tpu.memory_space<semaphore_mem>>)
    tpu.wait_dma2 semaphore(%arg2 : memref<!tpu.dma_semaphore, #tpu.memory_space<semaphore_mem>>) src(%arg0 : memref<8x10xf32, #tpu.memory_space<any>>) dst(%arg1 : memref<8x10xf32, #tpu.memory_space<any>>)
    return
  }
}

</mosaic_0001>

<llo_original>
// kernel: tpu_custom_call.1
$region0: #{tpu_custom_call.1}
  #allocation0 [shape = 'u32[]', space=smem, size = 0x4, offset = 0x4, fixed_abs, tag = 'smem constant byte address 0x4 - core index']
  #allocation1 [shape = 'u32[144,128]{1,0:T(1,128)}', space=vmem, size = 0x12000, scoped, tag = 'internal scratch']
  #allocation2 [shape = 's32[1]{0}', space=sflag, size = 0x4, scoped, tag = 'scratch operand']
  #allocation3 [shape = 's32[]', space=sflag, size = 0x4, offset = 0, fixed_abs, tag = 'sflag constant byte address 0x0 - dummy sync flag']
  #allocation4 [shape = 'u32[0]{0}', space=smem, size = 0, offset = 0, fixed_abs, tag = 'smem constant byte address 0x0 - null']
  %s0 = inlined_call_operand.hbm [shape: f32[8,10], index: 0, kind: input, shape index: {}]
  %s1 = inlined_call_operand.hbm [shape: f32[8,10], index: 1, kind: output, shape index: {}]
  %s2 = sld [smem:[#allocation0]]
  $region2: #{tpu_custom_call.1} parent=0
    _
  %s4 = ssub.s32 1, %s2
  %s5 = scalar_select 0, %s4, %s2
  %s7 = sshll.u32 1, 14
  %s8 = sxor.u32 4294967295, %s7
  %12 = dma.general %s0, 128, %s1, [#allocation2], 131072, [#allocation4], 0, 0
  %s13 = smul.u32 8, 1
  %s14 = sshll.u32 %s13, 4
  %15 = dma.done [#allocation2], %s14
  %16 = vsyncmov [#allocation2]
  %s17 = vpop.sfrf %16
  %p18 = scmp.eq.s32.totalorder %s17, 0
  %p19 = pneg %p18
  %21 = shalt.err (%p19)

</llo_original>
